<compile_context>
chip_gen: v7x
topology: tpu7x:2x2x1
jax: 0.10.0
libtpu: 0.0.40
codegen_flags: <defaults>
</compile_context>

<pallas_src>
import functools

import jax
import jax.numpy as jnp
from jax.experimental import pallas as pl
from jax.experimental.pallas import tpu as pltpu


def _round_up(v, m):
    return (v + m - 1) // m * m


# ----------------------------------------------------------------------------
# Kernel 1: tiled matmul with fused shift / residual / ReLU epilogue.
#   y = relu( (x @ w) + shift [+ residual] )     (BN scale pre-folded into w)
# ----------------------------------------------------------------------------

def _fused_matmul_kernel(*refs, relu, has_res):
    if has_res:
        x_ref, w_ref, s_ref, r_ref, o_ref, acc_ref = refs
    else:
        x_ref, w_ref, s_ref, o_ref, acc_ref = refs
        r_ref = None
    kk = pl.program_id(2)

    @pl.when(kk == 0)
    def _():
        acc_ref[...] = jnp.zeros_like(acc_ref)

    acc_ref[...] += jnp.dot(x_ref[...], w_ref[...],
                            preferred_element_type=jnp.float32)

    @pl.when(kk == pl.num_programs(2) - 1)
    def _():
        y = acc_ref[...] + s_ref[...]
        if has_res:
            y = y + r_ref[...].astype(jnp.float32)
        if relu:
            y = jnp.maximum(y, 0.0)
        o_ref[...] = y.astype(o_ref.dtype)


def _fused_matmul(x, w, shift, residual, *, relu, out_dtype):
    m, k = x.shape
    k2, n = w.shape
    assert k == k2

    tm = min(256, _round_up(m, 16))
    tn = min(256, _round_up(n, 128))
    tk = min(512, _round_up(k, 128))
    mp = _round_up(m, tm)
    np_ = _round_up(_round_up(n, 128), tn)
    kp = _round_up(_round_up(k, 128), tk)

    xp = jnp.pad(x.astype(jnp.bfloat16), ((0, mp - m), (0, kp - k)))
    wp = jnp.pad(w.astype(jnp.bfloat16), ((0, kp - k), (0, np_ - n)))
    sp = jnp.pad(shift.astype(jnp.float32).reshape(1, n), ((0, 0), (0, np_ - n)))

    has_res = residual is not None
    in_specs = [
        pl.BlockSpec((tm, tk), lambda i, j, kk: (i, kk)),
        pl.BlockSpec((tk, tn), lambda i, j, kk: (kk, j)),
        pl.BlockSpec((1, tn), lambda i, j, kk: (0, j)),
    ]
    operands = [xp, wp, sp]
    if has_res:
        rp = jnp.pad(residual.astype(jnp.bfloat16),
                     ((0, mp - m), (0, np_ - n)))
        in_specs.append(pl.BlockSpec((tm, tn), lambda i, j, kk: (i, j)))
        operands.append(rp)

    out = pl.pallas_call(
        functools.partial(_fused_matmul_kernel, relu=relu, has_res=has_res),
        out_shape=jax.ShapeDtypeStruct((mp, np_), out_dtype),
        grid_spec=pltpu.PrefetchScalarGridSpec(
            num_scalar_prefetch=0,
            grid=(mp // tm, np_ // tn, kp // tk),
            in_specs=in_specs,
            out_specs=pl.BlockSpec((tm, tn), lambda i, j, kk: (i, j)),
            scratch_shapes=[pltpu.VMEM((tm, tn), jnp.float32)]),
        compiler_params=pltpu.CompilerParams(
            dimension_semantics=("parallel", "parallel", "arbitrary"),
            vmem_limit_bytes=32 * 1024 * 1024),
    )(*operands)
    return out[:m, :n]


# ----------------------------------------------------------------------------
# Kernel 2: stride-1 3x3 conv without materialized im2col.
#   The padded activation is flattened to (rows, Cin); for each of the 9
#   kernel positions the kernel DMAs a shifted slab (double-buffered) and
#   accumulates slab @ W[p] on the MXU.  Border rows of the flat output are
#   garbage and sliced away in the wrapper.
# ----------------------------------------------------------------------------

def _conv3x3_s1_kernel(x_hbm, w_ref, shift_ref, o_ref, xbuf, sem, acc_ref,
                       *, offs, tm, relu):
    i = pl.program_id(1)          # M-tile index (inner grid axis)
    base = i * tm

    def issue(p, slot):
        cp = pltpu.make_async_copy(
            x_hbm.at[pl.ds(base + offs[p], tm)],
            xbuf.at[slot], sem.at[slot])
        cp.start()
        return cp

    copies = [None, None]
    copies[0] = issue(0, 0)
    acc_ref[...] = jnp.zeros_like(acc_ref)
    for p in range(9):            # static unroll over kernel positions
        slot = p & 1
        copies[slot].wait()
        if p + 1 < 9:
            copies[1 - slot] = issue(p + 1, 1 - slot)
        acc_ref[...] += jnp.dot(xbuf[slot], w_ref[p],
                                preferred_element_type=jnp.float32)

    y = acc_ref[...] + shift_ref[...]
    if relu:
        y = jnp.maximum(y, 0.0)
    o_ref[...] = y.astype(o_ref.dtype)


@functools.partial(jax.jit, static_argnames=("relu",))
def conv3x3_s1(x, w9, shift, *, relu):
    # x: (N, H, W, Cin) bf16/f32, w9: (9, Cin, Cout), shift: (Cout,)
    n, h, w, c = x.shape
    cout = w9.shape[-1]
    hp, wp = h + 2, w + 2

    xpad = jnp.pad(x.astype(jnp.bfloat16), ((0, 0), (1, 1), (1, 1), (0, 0)))
    m = n * hp * wp
    tm = min(256, _round_up(m, 16))
    mp = _round_up(m, tm)
    halo = wp + 1
    xflat = jnp.pad(xpad.reshape(m, c), ((halo, mp - m + halo), (0, 0)))

    np_ = _round_up(cout, 128)
    tn = min(256, np_)
    np_ = _round_up(np_, tn)
    w9p = jnp.pad(w9.astype(jnp.bfloat16), ((0, 0), (0, 0), (0, np_ - cout)))
    sp = jnp.pad(shift.astype(jnp.float32), ((0, np_ - cout),)).reshape(1, np_)

    offs = tuple(ki * wp + kj for ki in range(3) for kj in range(3))

    yfull = pl.pallas_call(
        functools.partial(_conv3x3_s1_kernel, offs=offs, tm=tm, relu=relu),
        out_shape=jax.ShapeDtypeStruct((mp, np_), jnp.bfloat16),
        grid_spec=pltpu.PrefetchScalarGridSpec(
            num_scalar_prefetch=0,
            grid=(np_ // tn, mp // tm),          # N tiles outer, M tiles inner
            in_specs=[pl.BlockSpec(memory_space=pl.ANY),
                      pl.BlockSpec((9, c, tn), lambda j, i: (0, 0, j)),
                      pl.BlockSpec((1, tn), lambda j, i: (0, j))],
            out_specs=pl.BlockSpec((tm, tn), lambda j, i: (i, j)),
            scratch_shapes=[pltpu.VMEM((2, tm, c), jnp.bfloat16),
                            pltpu.SemaphoreType.DMA((2,)),
                            pltpu.VMEM((tm, tn), jnp.float32)]),
        compiler_params=pltpu.CompilerParams(
            dimension_semantics=("parallel", "parallel"),
            vmem_limit_bytes=32 * 1024 * 1024),
    )(xflat, w9p, sp)

    y = yfull[:m].reshape(n, hp, wp, np_)[:, 1:1 + h, 1:1 + w, :cout]
    return y


# ----------------------------------------------------------------------------
# Kernel 3: 3x3 / stride-2 / pad-1 max pool (fused, per-image grid).
# ----------------------------------------------------------------------------

def _maxpool_kernel(ee_ref, eo_ref, oe_ref, oo_ref, o_ref, *, ho, wo):
    ee = ee_ref[0]
    eo = eo_ref[0]
    oe = oe_ref[0]
    oo = oo_ref[0]
    m = jnp.maximum(jnp.maximum(ee[:ho, :wo], eo[:ho, :wo]),
                    jnp.maximum(oe[:ho, :wo], oo[:ho, :wo]))
    m = jnp.maximum(m, jnp.maximum(ee[:ho, 1:], oe[:ho, 1:]))
    m = jnp.maximum(m, jnp.maximum(ee[1:, :wo], eo[1:, :wo]))
    m = jnp.maximum(m, ee[1:, 1:])
    o_ref[...] = m[None]


@jax.jit
def maxpool_3x3_s2(x):
    # inputs are post-ReLU, so 0-padding is equivalent to -inf padding.
    n, h, w, c = x.shape
    ho = (h - 1) // 2 + 1
    wo = (w - 1) // 2 + 1
    hp = 2 * (ho + 1)
    wp = 2 * (wo + 1)
    xp = jnp.pad(x, ((0, 0), (1, hp - 1 - h), (1, wp - 1 - w), (0, 0)))
    xr = xp.reshape(n, ho + 1, 2, wo + 1, 2, c)
    ee = xr[:, :, 0, :, 0, :]
    eo = xr[:, :, 0, :, 1, :]
    oe = xr[:, :, 1, :, 0, :]
    oo = xr[:, :, 1, :, 1, :]
    spec = pl.BlockSpec((1, ho + 1, wo + 1, c), lambda b: (b, 0, 0, 0))
    return pl.pallas_call(
        functools.partial(_maxpool_kernel, ho=ho, wo=wo),
        out_shape=jax.ShapeDtypeStruct((n, ho, wo, c), x.dtype),
        grid_spec=pltpu.PrefetchScalarGridSpec(
            num_scalar_prefetch=0, grid=(n,),
            in_specs=[spec, spec, spec, spec],
            out_specs=pl.BlockSpec((1, ho, wo, c), lambda b: (b, 0, 0, 0))),
        compiler_params=pltpu.CompilerParams(
            dimension_semantics=("parallel",)),
    )(ee, eo, oe, oo)


# ----------------------------------------------------------------------------
# Kernel 4: global average pool (grid over batch).
# ----------------------------------------------------------------------------

def _gap_kernel(x_ref, o_ref, *, inv_n):
    o_ref[...] = jnp.sum(x_ref[...].astype(jnp.float32), axis=1,
                         keepdims=True) * inv_n


@jax.jit
def global_avgpool(x):
    n, h, w, c = x.shape
    xr = x.reshape(n, h * w, c)
    out = pl.pallas_call(
        functools.partial(_gap_kernel, inv_n=1.0 / float(h * w)),
        out_shape=jax.ShapeDtypeStruct((n, 1, c), jnp.float32),
        grid_spec=pltpu.PrefetchScalarGridSpec(
            num_scalar_prefetch=0, grid=(n,),
            in_specs=[pl.BlockSpec((1, h * w, c), lambda b: (b, 0, 0))],
            out_specs=pl.BlockSpec((1, 1, c), lambda b: (b, 0, 0))),
        compiler_params=pltpu.CompilerParams(
            dimension_semantics=("parallel",)),
    )(xr)
    return out.reshape(n, c)


# ----------------------------------------------------------------------------
# JAX glue wrappers (each jitted so padding/reshape fuse with the kernel call)
# ----------------------------------------------------------------------------

def _im2col(x, kh, kw, stride, pad):
    if pad:
        x = jnp.pad(x, ((0, 0), (pad, pad), (pad, pad), (0, 0)))
    n, h, w, c = x.shape
    ho = (h - kh) // stride + 1
    wo = (w - kw) // stride + 1
    cols = []
    for i in range(kh):
        for j in range(kw):
            cols.append(x[:, i:i + stride * ho:stride, j:j + stride * wo:stride, :])
    p = jnp.stack(cols, axis=3)                 # (N, Ho, Wo, kh*kw, C)
    return p.reshape(n * ho * wo, kh * kw * c), (n, ho, wo)


@functools.partial(jax.jit, static_argnames=("kh", "kw", "stride", "pad", "relu"))
def conv_im2col(x, w, shift, *, kh, kw, stride, pad, relu):
    # used only for conv1 (7x7/s2) and the three stride-2 3x3 convs.
    cin = x.shape[-1]
    cout = w.shape[-1]
    cols, (n, ho, wo) = _im2col(x.astype(jnp.bfloat16), kh, kw, stride, pad)
    y = _fused_matmul(cols, w.reshape(kh * kw * cin, cout), shift, None,
                      relu=relu, out_dtype=jnp.bfloat16)
    return y.reshape(n, ho, wo, cout)


@functools.partial(jax.jit, static_argnames=("stride", "relu"))
def conv1x1(x, w, shift, residual=None, *, stride, relu):
    if stride > 1:
        x = x[:, ::stride, ::stride, :]
    n, h, ww, c = x.shape
    cout = w.shape[-1]
    res = None if residual is None else residual.reshape(n * h * ww, cout)
    y = _fused_matmul(x.reshape(n * h * ww, c), w.reshape(c, cout), shift, res,
                      relu=relu, out_dtype=jnp.bfloat16)
    return y.reshape(n, h, ww, cout)


@functools.partial(jax.jit, static_argnames=("relu",))
def linear(x, w, shift, *, relu=False):
    # TODO(synk): fc+reg could be merged into one pallas_call; kept separate.
    return _fused_matmul(x, w, shift, None, relu=relu, out_dtype=jnp.float32)


def bottleneck(x, block_params, stride):
    p1, p2, p3, pdown = block_params
    if pdown is not None:
        identity = conv1x1(x, pdown[0], pdown[1], stride=stride, relu=False)
    else:
        identity = x
    out = conv1x1(x, p1[0], p1[1], stride=1, relu=True)
    if stride == 1:
        out = conv3x3_s1(out, p2[0], p2[1], relu=True)
    else:
        out = conv_im2col(out, p2[0], p2[1], kh=3, kw=3, stride=stride, pad=1,
                          relu=True)
    # residual add + ReLU fused into the conv3 epilogue.
    out = conv1x1(out, p3[0], p3[1], identity, stride=1, relu=True)
    return out


# ----------------------------------------------------------------------------
# Deterministic parameter initialization (resnet101 structure, BN folded)
# ----------------------------------------------------------------------------

ARCH = [(64, 3, 1), (128, 4, 2), (256, 23, 2), (512, 3, 2)]  # (planes, blocks, stride)
BN_EPS = 1e-5


def conv_bn_params(key, kh, kw, cin, cout):
    fan_in = kh * kw * cin
    w = jax.random.normal(key, (kh * kw, cin, cout), jnp.float32) * (2.0 / fan_in) ** 0.5
    gamma = jnp.ones((cout,), jnp.float32)
    beta = jnp.zeros((cout,), jnp.float32)
    rmean = jnp.zeros((cout,), jnp.float32)
    rvar = jnp.ones((cout,), jnp.float32)
    scale = gamma / jnp.sqrt(rvar + BN_EPS)
    shift = beta - rmean * scale
    w_folded = (w * scale).astype(jnp.bfloat16)   # fold BN scale into weights
    return w_folded, shift


def linear_params(key, fin, fout):
    k1, k2 = jax.random.split(key)
    bound = 1.0 / (fin ** 0.5)
    w = jax.random.uniform(k1, (fin, fout), jnp.float32, -bound, bound)
    b = jax.random.uniform(k2, (fout,), jnp.float32, -bound, bound)
    return w.astype(jnp.bfloat16), b


def init_params(key):
    keys = iter(jax.random.split(key, 256))
    params = {"conv1": conv_bn_params(next(keys), 7, 7, 3, 64)}
    layers = []
    inplanes = 64
    for planes, nblocks, stride in ARCH:
        blocks = []
        for b in range(nblocks):
            s = stride if b == 0 else 1
            p1 = conv_bn_params(next(keys), 1, 1, inplanes, planes)
            p2 = conv_bn_params(next(keys), 3, 3, planes, planes)
            p3 = conv_bn_params(next(keys), 1, 1, planes, planes * 4)
            if s != 1 or inplanes != planes * 4:
                pdown = conv_bn_params(next(keys), 1, 1, inplanes, planes * 4)
            else:
                pdown = None
            blocks.append((p1, p2, p3, pdown))
            inplanes = planes * 4
        layers.append(blocks)
    params["layers"] = layers
    params["fc"] = linear_params(next(keys), 2048, 128)   # conv.fc = Linear(2048,128)
    params["reg"] = linear_params(next(keys), 128, 1)     # reg     = Linear(128,1)
    return params


# ----------------------------------------------------------------------------
# Forward pass:  y = resnet101(x);  y_value = reg(y) + 1975
# ----------------------------------------------------------------------------

def cnn_forward(params, x_nchw):
    x = jnp.transpose(x_nchw.astype(jnp.float32), (0, 2, 3, 1))  # NCHW -> NHWC
    w1, s1 = params["conv1"]
    x = conv_im2col(x, w1, s1, kh=7, kw=7, stride=2, pad=3, relu=True)
    x = maxpool_3x3_s2(x)
    for (planes, nblocks, stride), blocks in zip(ARCH, params["layers"]):
        for b, block_params in enumerate(blocks):
            x = bottleneck(x, block_params, stride if b == 0 else 1)
    feat = global_avgpool(x)                                     # (N, 2048) f32

    w_fc, b_fc = params["fc"]
    y = linear(feat, w_fc, b_fc, relu=False)                     # (N, 128) f32

    w_reg, b_reg = params["reg"]
    # "+ 1975" is fused into the kernel's shift term.
    y_value = linear(y, w_reg, b_reg + 1975.0, relu=False)       # (N, 1) f32
    return y, y_value


if __name__ == "__main__":
    key = jax.random.PRNGKey(0)
    pkey, xkey = jax.random.split(key)
    params = init_params(pkey)
    x = jax.random.normal(xkey, (2, 3, 32, 32), jnp.float32)     # small NCHW input

    y, y_value = cnn_forward(params, x)
    jax.block_until_ready((y, y_value))

    assert y.shape == (2, 128) and y.dtype == jnp.float32
    assert y_value.shape == (2, 1) and y_value.dtype == jnp.float32
    assert bool(jnp.all(jnp.isfinite(y))) and bool(jnp.all(jnp.isfinite(y_value)))
    print("KERNEL_OK")
</pallas_src>

<mosaic_0001>
module attributes {stable_mosaic.version = 11 : i64} {
  func.func @_fused_matmul_kernel(%arg0: i32, %arg1: i32, %arg2: i32, %arg3: memref<256x256xbf16, #tpu.memory_space<vmem>>, %arg4: memref<256x128xbf16, #tpu.memory_space<vmem>>, %arg5: memref<1x128xf32, #tpu.memory_space<vmem>>, %arg6: memref<256x128xbf16, #tpu.memory_space<vmem>>, %arg7: memref<256x128xf32, #tpu.memory_space<vmem>>) attributes {dimension_semantics = [#tpu.dimension_semantics<parallel>, #tpu.dimension_semantics<parallel>, #tpu.dimension_semantics<arbitrary>], iteration_bounds = array<i64: 2, 1, 1>, scalar_prefetch = 0 : i64, scratch_operands = 1 : i64, tpu.core_type = #tpu.core_type<tc>, window_params = [{transform_indices = @transform_0, window_bounds = array<i64: 256, 256>}, {transform_indices = @transform_1, window_bounds = array<i64: 256, 128>}, {transform_indices = @transform_2, window_bounds = array<i64: 1, 128>}, {transform_indices = @transform_3, window_bounds = array<i64: 256, 128>}]} {
    %c0_i32 = arith.constant 0 : i32
    %0 = arith.cmpi eq, %arg2, %c0_i32 : i32
    %1 = arith.extui %0 : i1 to i32
    %c0_i32_0 = arith.constant 0 : i32
    %2 = arith.cmpi ne, %1, %c0_i32_0 : i32
    scf.if %2 {
      %cst_10 = arith.constant 0.000000e+00 : f32
      %12 = vector.broadcast %cst_10 : f32 to vector<256x128xf32>
      %c0_11 = arith.constant 0 : index
      %c0_12 = arith.constant 0 : index
      %13 = vector.load %arg7[%c0_11, %c0_12] : memref<256x128xf32, #tpu.memory_space<vmem>>, vector<256x128xf32>
      tpu.vector_store %arg7[%c0_11, %c0_12], %12 {strides = array<i32>} : memref<256x128xf32, #tpu.memory_space<vmem>>, vector<256x128xf32>,
    } else {
    }
    %c0 = arith.constant 0 : index
    %c0_1 = arith.constant 0 : index
    %3 = vector.load %arg7[%c0, %c0_1] : memref<256x128xf32, #tpu.memory_space<vmem>>, vector<256x128xf32>
    %c0_2 = arith.constant 0 : index
    %c0_3 = arith.constant 0 : index
    %4 = vector.load %arg3[%c0_2, %c0_3] : memref<256x256xbf16, #tpu.memory_space<vmem>>, vector<256x256xbf16>
    %c0_4 = arith.constant 0 : index
    %c0_5 = arith.constant 0 : index
    %5 = vector.load %arg4[%c0_4, %c0_5] : memref<256x128xbf16, #tpu.memory_space<vmem>>, vector<256x128xbf16>
    %cst = arith.constant dense<0.000000e+00> : vector<256x128xf32>
    %6 = tpu.matmul %4, %5, %cst {dimension_numbers = #tpu.dot_dimension_numbers<[1], [0], [0], [1], [0, 0, 1, 1], [], []>} : vector<256x256xbf16>, vector<256x128xbf16>, vector<256x128xf32> -> vector<256x128xf32>
    %7 = arith.addf %3, %6 : vector<256x128xf32>
    %c0_6 = arith.constant 0 : index
    %c0_7 = arith.constant 0 : index
    %8 = vector.load %arg7[%c0_6, %c0_7] : memref<256x128xf32, #tpu.memory_space<vmem>>, vector<256x128xf32>
    tpu.vector_store %arg7[%c0_6, %c0_7], %7 {strides = array<i32>} : memref<256x128xf32, #tpu.memory_space<vmem>>, vector<256x128xf32>,
    %c0_i32_8 = arith.constant 0 : i32
    %9 = arith.cmpi eq, %arg2, %c0_i32_8 : i32
    %10 = arith.extui %9 : i1 to i32
    %c0_i32_9 = arith.constant 0 : i32
    %11 = arith.cmpi ne, %10, %c0_i32_9 : i32
    scf.if %11 {
      %c0_10 = arith.constant 0 : index
      %c0_11 = arith.constant 0 : index
      %12 = vector.load %arg7[%c0_10, %c0_11] : memref<256x128xf32, #tpu.memory_space<vmem>>, vector<256x128xf32>
      %c0_12 = arith.constant 0 : index
      %c0_13 = arith.constant 0 : index
      %13 = vector.load %arg5[%c0_12, %c0_13] : memref<1x128xf32, #tpu.memory_space<vmem>>, vector<1x128xf32>
      %14 = vector.broadcast %13 : vector<1x128xf32> to vector<256x128xf32>
      %15 = arith.addf %12, %14 : vector<256x128xf32>
      %cst_14 = arith.constant 0.000000e+00 : f32
      %16 = vector.broadcast %cst_14 : f32 to vector<256x128xf32>
      %17 = arith.maximumf %15, %16 : vector<256x128xf32>
      %18 = arith.truncf %17 : vector<256x128xf32> to vector<256x128xbf16>
      %c0_15 = arith.constant 0 : index
      %c0_16 = arith.constant 0 : index
      %19 = vector.load %arg6[%c0_15, %c0_16] : memref<256x128xbf16, #tpu.memory_space<vmem>>, vector<256x128xbf16>
      tpu.vector_store %arg6[%c0_15, %c0_16], %18 {strides = array<i32>} : memref<256x128xbf16, #tpu.memory_space<vmem>>, vector<256x128xbf16>,
    } else {
    }
    return
  }
  func.func @transform_0(%arg0: i32, %arg1: i32, %arg2: i32) -> (i32, i32) {
    %c0_i32 = arith.constant 0 : i32
    return %arg0, %arg2 : i32, i32
  }
  func.func @transform_1(%arg0: i32, %arg1: i32, %arg2: i32) -> (i32, i32) {
    %c0_i32 = arith.constant 0 : i32
    return %arg2, %arg1 : i32, i32
  }
  func.func @transform_2(%arg0: i32, %arg1: i32, %arg2: i32) -> (i32, i32) {
    %c0_i32 = arith.constant 0 : i32
    %c0_i32_0 = arith.constant 0 : i32
    return %c0_i32, %arg1 : i32, i32
  }
  func.func @transform_3(%arg0: i32, %arg1: i32, %arg2: i32) -> (i32, i32) {
    %c0_i32 = arith.constant 0 : i32
    return %arg0, %arg1 : i32, i32
  }
}

</mosaic_0001>

<llo_original>
// kernel: conv_im2col.1
$region0: #{conv_im2col.1}
  #allocation0 [shape = 'u32[]', space=smem, size = 0x4, offset = 0x4, fixed_abs, tag = 'smem constant byte address 0x4 - core index']
  #allocation1 [shape = 'u32[144,128]{1,0:T(1,128)}', space=vmem, size = 0x12000, scoped, tag = 'internal scratch']
  #allocation2 [shape = 'f32[256,128]{1,0:T(8,128)}', space=vmem, size = 0x20000, scoped, tag = 'scratch operand']
  %s0 = inlined_call_operand.vmem [shape: bf16[512,256], index: 0, kind: input, shape index: {}]
  %s1 = inlined_call_operand.vmem [shape: bf16[256,128], index: 1, kind: input, shape index: {}]
  %s2 = inlined_call_operand.vmem [shape: f32[1,128], index: 2, kind: input, shape index: {}]
  %s3 = inlined_call_operand.hbm [shape: bf16[512,128], index: 3, kind: output, shape index: {}]
  %s4 = sld [smem:[#allocation0]]
  $region53: #{conv_im2col.1} parent=0
    _
  %s6 = ssub.s32 1, %s4
  %s7 = scalar_select 0, %s6, %s4
  $region1: #{conv_im2col.1} parent=0
    #allocation3 [shape = 'u8[131072]{0}', space=vmem, size = 0x20000, scoped, tag = 'output window, operand 0']
    #allocation4 [shape = 's32[2]{0}', space=sflag, size = 0x8, scoped, tag = 'scoped memory for conv_im2col.1']
    %8 = vsyncpa [#allocation4], 0
    %s9 = scalar_lea.sflag [#allocation4], 1
    %10 = vsyncpa %s9, 0
    loop: start=0, step=1, limit=4
    $region2: #{conv_im2col.1} parent=1 // loop_pre_header
      _
    $region3: #{conv_im2col.1} parent=1 // loop_header
      %s12 = sphi 0, %s16
      %p13 = scmp.ge.s32.totalorder %s12, 4
      %s19 = sphi 0, %s38
      %s20 = sphi 0, %s34
      %s21 = sphi 0, %s30
      %s22 = sphi 0, %s19
      %s23 = sphi 0, %s20
      %s24 = sphi 0, %s21
      %s25 = sphi 0, %s22
      %s26 = sphi 0, %s23
      %s27 = sphi 0, %s24
      %s43 = sphi 0, %s45
      %s46 = sphi 0, %s43
      %s47 = sphi 0, %s46
      %s63 = sphi 0, %s47
      %s71 = sphi 0, %s73
      %s74 = sphi 0, %s71
      %s75 = sphi 0, %s74
      %s91 = sphi 0, %s75
      %s97 = sphi 0, %s99
      %s100 = sphi 0, %s97
      %s101 = sphi 0, %s100
      %s117 = sphi 0, %s101
      %s125 = sphi 0, %s127
      %s128 = sphi 0, %s125
      %s129 = sphi 0, %s128
      %s145 = sphi 0, %s129
    $region4: #{conv_im2col.1} parent=1 // loop_header_branch
      %15 = sbr.rel (%p13) target = $region8
    $region5: #{conv_im2col.1} parent=1 // loop_body
      %s17 = ssub.s32 %s12, 1
      %s18 = ssub.s32 %s12, 2
      %s28 = sadd.s32 1, %s21
      %p29 = scmp.ge.s32.totalorder %s28, 1
      %s30 = scalar_select %p29, 0, %s28
      %s31 = sadd.s32 1, %s20
      %s32 = scalar_select %p29, %s31, %s20
      %p33 = scmp.ge.s32.totalorder %s32, 1
      %s34 = scalar_select %p33, 0, %s32
      %s35 = sadd.s32 1, %s19
      %s36 = scalar_select %p33, %s35, %s19
      %p37 = scmp.ge.s32.totalorder %s36, 2
      %s38 = scalar_select %p37, 0, %s36
      %s39 = ssub.s32 %s19, %s38
      %s40 = ssub.s32 %s21, %s30
      %s41 = sor.u32 %s39, %s40
      %p42 = scmp.eq.s32.totalorder %s41, 0
      %s44 = sadd.s32 %s43, 1
      %s45 = scalar_select %p42, %s43, %s44
      %p48 = pneg %p42
      %p49 = scmp.eq.s32.totalorder %s12, 1
      %p50 = por %p48, %p49
      %p51 = scmp.ne.s32.totalorder %s43, %s46
      %p52 = scmp.eq.s32.totalorder %s12, 0
      %p53 = por %p51, %p52
      %p54 = scmp.ne.s32.totalorder %s43, %s46
      %p55 = scmp.eq.s32.totalorder %s17, 1
      %p56 = por %p54, %p55
      %p57 = scmp.ne.s32.totalorder %s46, %s47
      %p58 = scmp.eq.s32.totalorder %s17, 0
      %p59 = por %p57, %p58
      %p60 = scmp.ne.s32.totalorder %s46, %s47
      %p61 = scmp.eq.s32.totalorder %s18, 1
      %p62 = por %p60, %p61
      %p64 = scmp.ne.s32.totalorder %s47, %s63
      %p65 = scmp.eq.s32.totalorder %s18, 0
      %p66 = por %p64, %p65
      %s67 = ssub.s32 %s21, %s30
      %s68 = ssub.s32 %s20, %s34
      %s69 = sor.u32 %s67, %s68
      %p70 = scmp.eq.s32.totalorder %s69, 0
      %s72 = sadd.s32 %s71, 1
      %s73 = scalar_select %p70, %s71, %s72
      %p76 = pneg %p70
      %p77 = scmp.eq.s32.totalorder %s12, 1
      %p78 = por %p76, %p77
      %p79 = scmp.ne.s32.totalorder %s71, %s74
      %p80 = scmp.eq.s32.totalorder %s12, 0
      %p81 = por %p79, %p80
      %p82 = scmp.ne.s32.totalorder %s71, %s74
      %p83 = scmp.eq.s32.totalorder %s17, 1
      %p84 = por %p82, %p83
      %p85 = scmp.ne.s32.totalorder %s74, %s75
      %p86 = scmp.eq.s32.totalorder %s17, 0
      %p87 = por %p85, %p86
      %p88 = scmp.ne.s32.totalorder %s74, %s75
      %p89 = scmp.eq.s32.totalorder %s18, 1
      %p90 = por %p88, %p89
      %p92 = scmp.ne.s32.totalorder %s75, %s91
      %p93 = scmp.eq.s32.totalorder %s18, 0
      %p94 = por %p92, %p93
      %s95 = ssub.s32 %s20, %s34
      %p96 = scmp.eq.s32.totalorder %s95, 0
      %s98 = sadd.s32 %s97, 1
      %s99 = scalar_select %p96, %s97, %s98
      %p102 = pneg %p96
      %p103 = scmp.eq.s32.totalorder %s12, 1
      %p104 = por %p102, %p103
      %p105 = scmp.ne.s32.totalorder %s97, %s100
      %p106 = scmp.eq.s32.totalorder %s12, 0
      %p107 = por %p105, %p106
      %p108 = scmp.ne.s32.totalorder %s97, %s100
      %p109 = scmp.eq.s32.totalorder %s17, 1
      %p110 = por %p108, %p109
      %p111 = scmp.ne.s32.totalorder %s100, %s101
      %p112 = scmp.eq.s32.totalorder %s17, 0
      %p113 = por %p111, %p112
      %p114 = scmp.ne.s32.totalorder %s100, %s101
      %p115 = scmp.eq.s32.totalorder %s18, 1
      %p116 = por %p114, %p115
      %p118 = scmp.ne.s32.totalorder %s101, %s117
      %p119 = scmp.eq.s32.totalorder %s18, 0
      %p120 = por %p118, %p119
      %s121 = ssub.s32 %s19, %s38
      %s122 = ssub.s32 %s20, %s34
      %s123 = sor.u32 %s121, %s122
      %p124 = scmp.eq.s32.totalorder %s123, 0
      %s126 = sadd.s32 %s125, 1
      %s127 = scalar_select %p124, %s125, %s126
      %p130 = pneg %p124
      %p131 = scmp.eq.s32.totalorder %s12, 1
      %p132 = por %p130, %p131
      %p133 = scmp.ne.s32.totalorder %s125, %s128
      %p134 = scmp.eq.s32.totalorder %s12, 0
      %p135 = por %p133, %p134
      %p136 = scmp.ne.s32.totalorder %s125, %s128
      %p137 = scmp.eq.s32.totalorder %s17, 1
      %p138 = por %p136, %p137
      %p139 = scmp.ne.s32.totalorder %s128, %s129
      %p140 = scmp.eq.s32.totalorder %s17, 0
      %p141 = por %p139, %p140
      %p142 = scmp.ne.s32.totalorder %s128, %s129
      %p143 = scmp.eq.s32.totalorder %s18, 1
      %p144 = por %p142, %p143
      %p146 = scmp.ne.s32.totalorder %s129, %s145
      %p147 = scmp.eq.s32.totalorder %s18, 0
      %p148 = por %p146, %p147
      %p149 = scmp.le.s32.totalorder 1, %s12
      %p150 = scmp.lt.s32.totalorder %s12, 3
      %p151 = pnand %p149, %p150
      %p152 = pneg %p151
      // Predicated region
      $region9: #{conv_im2col.1} parent=5 // pred_check
        _
      $region10: #{conv_im2col.1} parent=5 // pred_check_branch
        %154 = sbr.rel (%p151) target = $region12
      $region11: #{conv_im2col.1} parent=5 // pred_region
        %s155 = ssub.s32 %s12, 1
        // Predicated region
        $region13: #{conv_im2col.1} parent=11 // pred_check
          %p156 = pneg %p87
        $region14: #{conv_im2col.1} parent=11 // pred_check_branch
          %158 = sbr.rel (%p156) target = $region16
        $region15: #{conv_im2col.1} parent=11 // pred_region
          %s159 = smul.u32 32, %s24
          %p160 = scmp.lt.s32.totalorder %s159, 31
          %s161 = scalar_select %p160, %s159, 31
          %p162 = scmp.lt.s32.totalorder %s23, 0
          %s163 = scalar_select %p162, %s23, 0
          %s164 = sadd.s32 %s163, %s161
          %s165 = smul.addr %s164, 4
          %s166 = scalar_lea.vmem %s1, %s165
          %s167 = smul.u32 32, %s24
        $region16: #{conv_im2col.1} parent=11 // pred_fallthru
          _
        // Predicated region
        $region17: #{conv_im2col.1} parent=11 // pred_check
          %p168 = pneg %p113
        $region18: #{conv_im2col.1} parent=11 // pred_check_branch
          %170 = sbr.rel (%p168) target = $region20
        $region19: #{conv_im2col.1} parent=11 // pred_region
          %p171 = scmp.lt.s32.totalorder %s23, 0
          %s172 = scalar_select %p171, %s23, 0
          %s173 = scalar_lea.vmem %s2, %s172
        $region20: #{conv_im2col.1} parent=11 // pred_fallthru
          _
      $region12: #{conv_im2col.1} parent=5 // pred_fallthru
        _
      %p174 = scmp.lt.s32.totalorder %s12, 2
      // Predicated region
      $region21: #{conv_im2col.1} parent=5 // pred_check
        %p175 = pneg %p174
      $region22: #{conv_im2col.1} parent=5 // pred_check_branch
        %177 = sbr.rel (%p175) target = $region24
      $region23: #{conv_im2col.1} parent=5 // pred_region
        // Predicated region
        $region25: #{conv_im2col.1} parent=23 // pred_check
          %p178 = pneg %p53
        $region26: #{conv_im2col.1} parent=23 // pred_check_branch
          %180 = sbr.rel (%p178) target = $region28
        $region27: #{conv_im2col.1} parent=23 // pred_region
          %s181 = smul.u32 32, %s19
          %s182 = smul.u32 2, %s21
          %p183 = scmp.lt.s32.totalorder %s181, 63
          %s184 = scalar_select %p183, %s181, 63
          %p185 = scmp.lt.s32.totalorder %s182, 1
          %s186 = scalar_select %p185, %s182, 1
          %s187 = smul.addr %s184, 2
          %s188 = sadd.s32 %s186, %s187
          %s189 = smul.addr %s188, 4
          %s190 = scalar_lea.vmem %s0, %s189
          %s191 = smul.u32 32, %s19
          %s192 = smul.u32 2, %s21
        $region28: #{conv_im2col.1} parent=23 // pred_fallthru
          _
      $region24: #{conv_im2col.1} parent=5 // pred_fallthru
        _
      %p193 = scmp.le.s32.totalorder 1, %s12
      %p194 = scmp.lt.s32.totalorder %s12, 3
      %p195 = pnand %p193, %p194
      %p196 = pneg %p195
      // Predicated region
      $region29: #{conv_im2col.1} parent=5 // pred_check
        _
      $region30: #{conv_im2col.1} parent=5 // pred_check_branch
        %198 = sbr.rel (%p195) target = $region32
      $region31: #{conv_im2col.1} parent=5 // pred_region
        %s199 = ssub.s32 %s12, 1
        %s200 = smul.u32 32, %s22
        %s201 = smul.u32 2, %s24
        %p202 = scmp.lt.s32.totalorder %s200, 63
        %s203 = scalar_select %p202, %s200, 63
        %p204 = scmp.lt.s32.totalorder %s201, 1
        %s205 = scalar_select %p204, %s201, 1
        %s206 = smul.addr %s203, 2
        %s207 = sadd.s32 %s205, %s206
        %s208 = smul.addr %s207, 4
        %s209 = scalar_lea.vmem %s0, %s208
        %p210 = pneg %p59
        %p211 = pneg %p56
        %s212 = smul.u32 32, %s24
        %p213 = scmp.lt.s32.totalorder %s212, 31
        %s214 = scalar_select %p213, %s212, 31
        %p215 = scmp.lt.s32.totalorder %s23, 0
        %s216 = scalar_select %p215, %s23, 0
        %s217 = sadd.s32 %s216, %s214
        %s218 = smul.addr %s217, 4
        %s219 = scalar_lea.vmem %s1, %s218
        %p220 = pneg %p87
        %p221 = pneg %p84
        %p222 = scmp.lt.s32.totalorder %s23, 0
        %s223 = scalar_select %p222, %s23, 0
        %s224 = scalar_lea.vmem %s2, %s223
        %p225 = pneg %p113
        %p226 = pneg %p110
        %p227 = pneg %p141
        %p228 = pneg %p138
        %s229 = sand.u32 %s128, 1
        %s230 = scalar_lea.sflag [#allocation4], %s229
        %s231 = sand.u32 %s128, 1
        %s232 = smul.addr %s231, 128
        %s233 = scalar_lea.vmem [#allocation3], %s232
        %s234 = smul.u32 32, %s22
        %s235 = smul.u32 2, %s24
        %p236 = scmp.lt.s32.totalorder %s234, 63
        %s237 = scalar_select %p236, %s234, 63
        %p238 = scmp.lt.s32.totalorder %s235, 1
        %s239 = scalar_select %p238, %s235, 1
        %s240 = smul.addr %s237, 2
        %s241 = sadd.s32 %s239, %s240
        %s242 = smul.addr %s241, 4
        %s243 = scalar_lea.vmem %s0, %s242
        %s244 = smul.u32 32, %s22
        %s245 = smul.u32 2, %s24
        %s246 = smul.u32 32, %s24
        %p247 = scmp.lt.s32.totalorder %s246, 31
        %s248 = scalar_select %p247, %s246, 31
        %p249 = scmp.lt.s32.totalorder %s23, 0
        %s250 = scalar_select %p249, %s23, 0
        %s251 = sadd.s32 %s250, %s248
        %s252 = smul.addr %s251, 4
        %s253 = scalar_lea.vmem %s1, %s252
        %s254 = smul.u32 32, %s24
        %p255 = scmp.lt.s32.totalorder %s23, 0
        %s256 = scalar_select %p255, %s23, 0
        %s257 = scalar_lea.vmem %s2, %s256
        %s258 = smul.u32 32, %s22
        %p260 = scmp.eq.s32.totalorder %s24, 0
        // Predicated region
        $region33: #{conv_im2col.1} parent=31 // pred_check
          %p261 = pneg %p260
        $region34: #{conv_im2col.1} parent=31 // pred_check_branch
          %263 = sbr.rel (%p261) target = $region36
        $region35: #{conv_im2col.1} parent=31 // pred_region
          %264 = vst [vmem:[#allocation2] sm:$0xff] 0.0
          %265 = vst [vmem:[#allocation2 + $0x8] sm:$0xff] 0.0
          %266 = vst [vmem:[#allocation2 + $0x10] sm:$0xff] 0.0
          %267 = vst [vmem:[#allocation2 + $0x18] sm:$0xff] 0.0
          %268 = vst [vmem:[#allocation2 + $0x20] sm:$0xff] 0.0
          %269 = vst [vmem:[#allocation2 + $0x28] sm:$0xff] 0.0
          %270 = vst [vmem:[#allocation2 + $0x30] sm:$0xff] 0.0
          %271 = vst [vmem:[#allocation2 + $0x38] sm:$0xff] 0.0
          %272 = vst [vmem:[#allocation2 + $0x40] sm:$0xff] 0.0
          %273 = vst [vmem:[#allocation2 + $0x48] sm:$0xff] 0.0
          %274 = vst [vmem:[#allocation2 + $0x50] sm:$0xff] 0.0
          %275 = vst [vmem:[#allocation2 + $0x58] sm:$0xff] 0.0
          %276 = vst [vmem:[#allocation2 + $0x60] sm:$0xff] 0.0
          %277 = vst [vmem:[#allocation2 + $0x68] sm:$0xff] 0.0
          %278 = vst [vmem:[#allocation2 + $0x70] sm:$0xff] 0.0
          %279 = vst [vmem:[#allocation2 + $0x78] sm:$0xff] 0.0
          %280 = vst [vmem:[#allocation2 + $0x80] sm:$0xff] 0.0
          %281 = vst [vmem:[#allocation2 + $0x88] sm:$0xff] 0.0
          %282 = vst [vmem:[#allocation2 + $0x90] sm:$0xff] 0.0
          %283 = vst [vmem:[#allocation2 + $0x98] sm:$0xff] 0.0
          %284 = vst [vmem:[#allocation2 + $0xa0] sm:$0xff] 0.0
          %285 = vst [vmem:[#allocation2 + $0xa8] sm:$0xff] 0.0
          %286 = vst [vmem:[#allocation2 + $0xb0] sm:$0xff] 0.0
          %287 = vst [vmem:[#allocation2 + $0xb8] sm:$0xff] 0.0
          %288 = vst [vmem:[#allocation2 + $0xc0] sm:$0xff] 0.0
          %289 = vst [vmem:[#allocation2 + $0xc8] sm:$0xff] 0.0
          %290 = vst [vmem:[#allocation2 + $0xd0] sm:$0xff] 0.0
          %291 = vst [vmem:[#allocation2 + $0xd8] sm:$0xff] 0.0
          %292 = vst [vmem:[#allocation2 + $0xe0] sm:$0xff] 0.0
          %293 = vst [vmem:[#allocation2 + $0xe8] sm:$0xff] 0.0
          %294 = vst [vmem:[#allocation2 + $0xf0] sm:$0xff] 0.0
          %295 = vst [vmem:[#allocation2 + $0xf8] sm:$0xff] 0.0
        $region36: #{conv_im2col.1} parent=31 // pred_fallthru
          _
        %v296 = vld [vmem:[#allocation2] sm:$0xff]
        %v297 = vld [vmem:[#allocation2 + $0x8] sm:$0xff]
        %v298 = vld [vmem:[#allocation2 + $0x10] sm:$0xff]
        %v299 = vld [vmem:[#allocation2 + $0x18] sm:$0xff]
        %v300 = vld [vmem:[#allocation2 + $0x20] sm:$0xff]
        %v301 = vld [vmem:[#allocation2 + $0x28] sm:$0xff]
        %v302 = vld [vmem:[#allocation2 + $0x30] sm:$0xff]
        %v303 = vld [vmem:[#allocation2 + $0x38] sm:$0xff]
        %v304 = vld [vmem:[#allocation2 + $0x40] sm:$0xff]
        %v305 = vld [vmem:[#allocation2 + $0x48] sm:$0xff]
        %v306 = vld [vmem:[#allocation2 + $0x50] sm:$0xff]
        %v307 = vld [vmem:[#allocation2 + $0x58] sm:$0xff]
        %v308 = vld [vmem:[#allocation2 + $0x60] sm:$0xff]
        %v309 = vld [vmem:[#allocation2 + $0x68] sm:$0xff]
        %v310 = vld [vmem:[#allocation2 + $0x70] sm:$0xff]
        %v311 = vld [vmem:[#allocation2 + $0x78] sm:$0xff]
        %v312 = vld [vmem:[#allocation2 + $0x80] sm:$0xff]
        %v313 = vld [vmem:[#allocation2 + $0x88] sm:$0xff]
        %v314 = vld [vmem:[#allocation2 + $0x90] sm:$0xff]
        %v315 = vld [vmem:[#allocation2 + $0x98] sm:$0xff]
        %v316 = vld [vmem:[#allocation2 + $0xa0] sm:$0xff]
        %v317 = vld [vmem:[#allocation2 + $0xa8] sm:$0xff]
        %v318 = vld [vmem:[#allocation2 + $0xb0] sm:$0xff]
        %v319 = vld [vmem:[#allocation2 + $0xb8] sm:$0xff]
        %v320 = vld [vmem:[#allocation2 + $0xc0] sm:$0xff]
        %v321 = vld [vmem:[#allocation2 + $0xc8] sm:$0xff]
        %v322 = vld [vmem:[#allocation2 + $0xd0] sm:$0xff]
        %v323 = vld [vmem:[#allocation2 + $0xd8] sm:$0xff]
        %v324 = vld [vmem:[#allocation2 + $0xe0] sm:$0xff]
        %v325 = vld [vmem:[#allocation2 + $0xe8] sm:$0xff]
        %v326 = vld [vmem:[#allocation2 + $0xf0] sm:$0xff]
        %v327 = vld [vmem:[#allocation2 + $0xf8] sm:$0xff]
        %v328 = vld [vmem:[%s243] sm:$0xff]
        %v329 = vld [vmem:[%s243 + $0x8] sm:$0xff]
        %v330 = vld [vmem:[%s243 + $0x10] sm:$0xff]
        %v331 = vld [vmem:[%s243 + $0x18] sm:$0xff]
        %v332 = vld [vmem:[%s243 + $0x20] sm:$0xff]
        %v333 = vld [vmem:[%s243 + $0x28] sm:$0xff]
        %v334 = vld [vmem:[%s243 + $0x30] sm:$0xff]
        %v335 = vld [vmem:[%s243 + $0x38] sm:$0xff]
        %v336 = vld [vmem:[%s243 + $0x40] sm:$0xff]
        %v337 = vld [vmem:[%s243 + $0x48] sm:$0xff]
        %v338 = vld [vmem:[%s243 + $0x50] sm:$0xff]
        %v339 = vld [vmem:[%s243 + $0x58] sm:$0xff]
        %v340 = vld [vmem:[%s243 + $0x60] sm:$0xff]
        %v341 = vld [vmem:[%s243 + $0x68] sm:$0xff]
        %v342 = vld [vmem:[%s243 + $0x70] sm:$0xff]
        %v343 = vld [vmem:[%s243 + $0x78] sm:$0xff]
        %v344 = vld [vmem:[%s243 + $0x80] sm:$0xff]
        %v345 = vld [vmem:[%s243 + $0x88] sm:$0xff]
        %v346 = vld [vmem:[%s243 + $0x90] sm:$0xff]
        %v347 = vld [vmem:[%s243 + $0x98] sm:$0xff]
        %v348 = vld [vmem:[%s243 + $0xa0] sm:$0xff]
        %v349 = vld [vmem:[%s243 + $0xa8] sm:$0xff]
        %v350 = vld [vmem:[%s243 + $0xb0] sm:$0xff]
        %v351 = vld [vmem:[%s243 + $0xb8] sm:$0xff]
        %v352 = vld [vmem:[%s243 + $0xc0] sm:$0xff]
        %v353 = vld [vmem:[%s243 + $0xc8] sm:$0xff]
        %v354 = vld [vmem:[%s243 + $0xd0] sm:$0xff]
        %v355 = vld [vmem:[%s243 + $0xd8] sm:$0xff]
        %v356 = vld [vmem:[%s243 + $0xe0] sm:$0xff]
        %v357 = vld [vmem:[%s243 + $0xe8] sm:$0xff]
        %v358 = vld [vmem:[%s243 + $0xf0] sm:$0xff]
        %v359 = vld [vmem:[%s243 + $0xf8] sm:$0xff]
        %v360 = vld [vmem:[%s253] sm:$0xf]
        %v361 = vld [vmem:[%s253 + $0x4] sm:$0xf]
        %v362 = vld [vmem:[%s253 + $0x8] sm:$0xf]
        %v363 = vld [vmem:[%s253 + $0xc] sm:$0xf]
        %v364 = vld [vmem:[%s253 + $0x10] sm:$0xf]
        %v365 = vld [vmem:[%s253 + $0x14] sm:$0xf]
        %v366 = vld [vmem:[%s253 + $0x18] sm:$0xf]
        %v367 = vld [vmem:[%s253 + $0x1c] sm:$0xf]
        %v368 = vld [vmem:[%s253 + $0x20] sm:$0xf]
        %v369 = vld [vmem:[%s253 + $0x24] sm:$0xf]
        %v370 = vld [vmem:[%s253 + $0x28] sm:$0xf]
        %v371 = vld [vmem:[%s253 + $0x2c] sm:$0xf]
        %v372 = vld [vmem:[%s253 + $0x30] sm:$0xf]
        %v373 = vld [vmem:[%s253 + $0x34] sm:$0xf]
        %v374 = vld [vmem:[%s253 + $0x38] sm:$0xf]
        %v375 = vld [vmem:[%s253 + $0x3c] sm:$0xf]
        %v376 = vld [vmem:[%s253 + $0x40] sm:$0xf]
        %v377 = vld [vmem:[%s253 + $0x44] sm:$0xf]
        %v378 = vld [vmem:[%s253 + $0x48] sm:$0xf]
        %v379 = vld [vmem:[%s253 + $0x4c] sm:$0xf]
        %v380 = vld [vmem:[%s253 + $0x50] sm:$0xf]
        %v381 = vld [vmem:[%s253 + $0x54] sm:$0xf]
        %v382 = vld [vmem:[%s253 + $0x58] sm:$0xf]
        %v383 = vld [vmem:[%s253 + $0x5c] sm:$0xf]
        %v384 = vld [vmem:[%s253 + $0x60] sm:$0xf]
        %v385 = vld [vmem:[%s253 + $0x64] sm:$0xf]
        %v386 = vld [vmem:[%s253 + $0x68] sm:$0xf]
        %v387 = vld [vmem:[%s253 + $0x6c] sm:$0xf]
        %v388 = vld [vmem:[%s253 + $0x70] sm:$0xf]
        %v389 = vld [vmem:[%s253 + $0x74] sm:$0xf]
        %v390 = vld [vmem:[%s253 + $0x78] sm:$0xf]
        %v391 = vld [vmem:[%s253 + $0x7c] sm:$0xf]
        %v424 = vunpack.c.l.b16 %v328
        %v425 = vunpack.c.h.b16 %v328
        %v426 = vunpack.c.l.b16 %v329
        %v427 = vunpack.c.h.b16 %v329
        %v428 = vunpack.c.l.b16 %v330
        %v429 = vunpack.c.h.b16 %v330
        %v430 = vunpack.c.l.b16 %v331
        %v431 = vunpack.c.h.b16 %v331
        %v432 = vunpack.c.l.b16 %v332
        %v433 = vunpack.c.h.b16 %v332
        %v434 = vunpack.c.l.b16 %v333
        %v435 = vunpack.c.h.b16 %v333
        %v436 = vunpack.c.l.b16 %v334
        %v437 = vunpack.c.h.b16 %v334
        %v438 = vunpack.c.l.b16 %v335
        %v439 = vunpack.c.h.b16 %v335
        %v440 = vunpack.c.l.b16 %v336
        %v441 = vunpack.c.h.b16 %v336
        %v442 = vunpack.c.l.b16 %v337
        %v443 = vunpack.c.h.b16 %v337
        %v444 = vunpack.c.l.b16 %v338
        %v445 = vunpack.c.h.b16 %v338
        %v446 = vunpack.c.l.b16 %v339
        %v447 = vunpack.c.h.b16 %v339
        %v448 = vunpack.c.l.b16 %v340
        %v449 = vunpack.c.h.b16 %v340
        %v450 = vunpack.c.l.b16 %v341
        %v451 = vunpack.c.h.b16 %v341
        %v452 = vunpack.c.l.b16 %v342
        %v453 = vunpack.c.h.b16 %v342
        %v454 = vunpack.c.l.b16 %v343
        %v455 = vunpack.c.h.b16 %v343
        %v456 = vunpack.c.l.b16 %v344
        %v457 = vunpack.c.h.b16 %v344
        %v458 = vunpack.c.l.b16 %v345
        %v459 = vunpack.c.h.b16 %v345
        %v460 = vunpack.c.l.b16 %v346
        %v461 = vunpack.c.h.b16 %v346
        %v462 = vunpack.c.l.b16 %v347
        %v463 = vunpack.c.h.b16 %v347
        %v464 = vunpack.c.l.b16 %v348
        %v465 = vunpack.c.h.b16 %v348
        %v466 = vunpack.c.l.b16 %v349
        %v467 = vunpack.c.h.b16 %v349
        %v468 = vunpack.c.l.b16 %v350
        %v469 = vunpack.c.h.b16 %v350
        %v470 = vunpack.c.l.b16 %v351
        %v471 = vunpack.c.h.b16 %v351
        %v472 = vunpack.c.l.b16 %v352
        %v473 = vunpack.c.h.b16 %v352
        %v474 = vunpack.c.l.b16 %v353
        %v475 = vunpack.c.h.b16 %v353
        %v476 = vunpack.c.l.b16 %v354
        %v477 = vunpack.c.h.b16 %v354
        %v478 = vunpack.c.l.b16 %v355
        %v479 = vunpack.c.h.b16 %v355
        %v480 = vunpack.c.l.b16 %v356
        %v481 = vunpack.c.h.b16 %v356
        %v482 = vunpack.c.l.b16 %v357
        %v483 = vunpack.c.h.b16 %v357
        %v484 = vunpack.c.l.b16 %v358
        %v485 = vunpack.c.h.b16 %v358
        %v486 = vunpack.c.l.b16 %v359
        %v487 = vunpack.c.h.b16 %v359
        %v488 = vpack.c.b16 %v426, %v424
        %v489 = vpack.c.b16 %v427, %v425
        %v490 = vpack.c.b16 %v430, %v428
        %v491 = vpack.c.b16 %v431, %v429
        %v492 = vpack.c.b16 %v434, %v432
        %v493 = vpack.c.b16 %v435, %v433
        %v494 = vpack.c.b16 %v438, %v436
        %v495 = vpack.c.b16 %v439, %v437
        %v496 = vpack.c.b16 %v442, %v440
        %v497 = vpack.c.b16 %v443, %v441
        %v498 = vpack.c.b16 %v446, %v444
        %v499 = vpack.c.b16 %v447, %v445
        %v500 = vpack.c.b16 %v450, %v448
        %v501 = vpack.c.b16 %v451, %v449
        %v502 = vpack.c.b16 %v454, %v452
        %v503 = vpack.c.b16 %v455, %v453
        %v504 = vpack.c.b16 %v458, %v456
        %v505 = vpack.c.b16 %v459, %v457
        %v506 = vpack.c.b16 %v462, %v460
        %v507 = vpack.c.b16 %v463, %v461
        %v508 = vpack.c.b16 %v466, %v464
        %v509 = vpack.c.b16 %v467, %v465
        %v510 = vpack.c.b16 %v470, %v468
        %v511 = vpack.c.b16 %v471, %v469
        %v512 = vpack.c.b16 %v474, %v472
        %v513 = vpack.c.b16 %v475, %v473
        %v514 = vpack.c.b16 %v478, %v476
        %v515 = vpack.c.b16 %v479, %v477
        %v516 = vpack.c.b16 %v482, %v480
        %v517 = vpack.c.b16 %v483, %v481
        %v518 = vpack.c.b16 %v486, %v484
        %v519 = vpack.c.b16 %v487, %v485
        %v584 = vunpack.c.l.b16 %v360
        %v585 = vunpack.c.l.b16 %v361
        %v586 = vunpack.c.l.b16 %v362
        %v587 = vunpack.c.l.b16 %v363
        %v588 = vunpack.c.l.b16 %v364
        %v589 = vunpack.c.l.b16 %v365
        %v590 = vunpack.c.l.b16 %v366
        %v591 = vunpack.c.l.b16 %v367
        %v592 = vunpack.c.l.b16 %v368
        %v593 = vunpack.c.l.b16 %v369
        %v594 = vunpack.c.l.b16 %v370
        %v595 = vunpack.c.l.b16 %v371
        %v596 = vunpack.c.l.b16 %v372
        %v597 = vunpack.c.l.b16 %v373
        %v598 = vunpack.c.l.b16 %v374
        %v599 = vunpack.c.l.b16 %v375
        %v600 = vunpack.c.l.b16 %v376
        %v601 = vunpack.c.l.b16 %v377
        %v602 = vunpack.c.l.b16 %v378
        %v603 = vunpack.c.l.b16 %v379
        %v604 = vunpack.c.l.b16 %v380
        %v605 = vunpack.c.l.b16 %v381
        %v606 = vunpack.c.l.b16 %v382
        %v607 = vunpack.c.l.b16 %v383
        %v608 = vunpack.c.l.b16 %v384
        %v609 = vunpack.c.l.b16 %v385
        %v610 = vunpack.c.l.b16 %v386
        %v611 = vunpack.c.l.b16 %v387
        %v612 = vunpack.c.l.b16 %v388
        %v613 = vunpack.c.l.b16 %v389
        %v614 = vunpack.c.l.b16 %v390
        %v615 = vunpack.c.l.b16 %v391
        %v616 = vpack.c.b16 %v585, %v584
        %v617 = vpack.c.b16 %v587, %v586
        %v618 = vpack.c.b16 %v589, %v588
        %v619 = vpack.c.b16 %v591, %v590
        %v620 = vpack.c.b16 %v593, %v592
        %v621 = vpack.c.b16 %v595, %v594
        %v622 = vpack.c.b16 %v597, %v596
        %v623 = vpack.c.b16 %v599, %v598
        %v624 = vpack.c.b16 %v601, %v600
        %v625 = vpack.c.b16 %v603, %v602
        %v626 = vpack.c.b16 %v605, %v604
        %v627 = vpack.c.b16 %v607, %v606
        %v628 = vpack.c.b16 %v609, %v608
        %v629 = vpack.c.b16 %v611, %v610
        %v630 = vpack.c.b16 %v613, %v612
        %v631 = vpack.c.b16 %v615, %v614
        %648 = vmatprep.subr.bf16.mxu0 0
        %649 = vmatpush1.bf16.msra.mxu0 %v616
        %650 = vmatprep.subr.bf16.mxu0 0
        %651 = vmatpush1.bf16.msra.mxu0 %v617
        %652 = vmatprep.subr.bf16.mxu0 0
        %653 = vmatpush1.bf16.msra.mxu0 %v618
        %654 = vmatprep.subr.bf16.mxu0 0
        %655 = vmatpush1.bf16.msra.mxu0 %v619
        %656 = vmatprep.subr.bf16.mxu0 0
        %657 = vmatpush1.bf16.msra.mxu0 %v620
        %658 = vmatprep.subr.bf16.mxu0 0
        %659 = vmatpush1.bf16.msra.mxu0 %v621
        %660 = vmatprep.subr.bf16.mxu0 0
        %661 = vmatpush1.bf16.msra.mxu0 %v622
        %662 = vmatprep.subr.bf16.mxu0 0
        %663 = vmatpush1.bf16.msra.mxu0 %v623
        %664 = vmatprep.subr.bf16.mxu0 0
        %665 = vmatpush1.bf16.msra.mxu0 %v624
        %666 = vmatprep.subr.bf16.mxu0 0
        %667 = vmatpush1.bf16.msra.mxu0 %v625
        %668 = vmatprep.subr.bf16.mxu0 0
        %669 = vmatpush1.bf16.msra.mxu0 %v626
        %670 = vmatprep.subr.bf16.mxu0 0
        %671 = vmatpush1.bf16.msra.mxu0 %v627
        %672 = vmatprep.subr.bf16.mxu0 0
        %673 = vmatpush1.bf16.msra.mxu0 %v628
        %674 = vmatprep.subr.bf16.mxu0 0
        %675 = vmatpush1.bf16.msra.mxu0 %v629
        %676 = vmatprep.subr.bf16.mxu0 0
        %677 = vmatpush1.bf16.msra.mxu0 %v630
        %678 = vmatprep.subr.bf16.mxu0 0
        %679 = vmatpush1.bf16.msra.mxu0 %v631
        %680 = vmatprep.mubr.bf16.mxu0 %v489
        %681 = vmatmul.mubr.bf16.gmra.mrb[0].mxu0 %v488
        %v682 = vpop.f32.mrb[0].mxu0
        %v683 = vadd.f32 0.0, %v682
        %v684 = vpop.f32.mrb[0].mxu0
        %v685 = vpop.f32.mrb[0].mxu0
        %v686 = vadd.f32 0.0, %v685
        %v687 = vpop.f32.mrb[0].mxu0
        %688 = vmatprep.mubr.bf16.mxu0 %v491
        %689 = vmatmul.mubr.bf16.gmra.mrb[0].mxu0 %v490
        %v690 = vpop.f32.mrb[0].mxu0
        %v691 = vadd.f32 0.0, %v690
        %v692 = vpop.f32.mrb[0].mxu0
        %v693 = vpop.f32.mrb[0].mxu0
        %v694 = vadd.f32 0.0, %v693
        %v695 = vpop.f32.mrb[0].mxu0
        %696 = vmatprep.mubr.bf16.mxu0 %v493
        %697 = vmatmul.mubr.bf16.gmra.mrb[0].mxu0 %v492
        %v698 = vpop.f32.mrb[0].mxu0
        %v699 = vadd.f32 0.0, %v698
        %v700 = vpop.f32.mrb[0].mxu0
        %v701 = vpop.f32.mrb[0].mxu0
        %v702 = vadd.f32 0.0, %v701
        %v703 = vpop.f32.mrb[0].mxu0
        %704 = vmatprep.mubr.bf16.mxu0 %v495
        %705 = vmatmul.mubr.bf16.gmra.mrb[0].mxu0 %v494
        %v706 = vpop.f32.mrb[0].mxu0
        %v707 = vadd.f32 0.0, %v706
        %v708 = vpop.f32.mrb[0].mxu0
        %v709 = vpop.f32.mrb[0].mxu0
        %v710 = vadd.f32 0.0, %v709
        %v711 = vpop.f32.mrb[0].mxu0
        %712 = vmatprep.mubr.bf16.mxu0 %v497
        %713 = vmatmul.mubr.bf16.gmra.mrb[0].mxu0 %v496
        %v714 = vpop.f32.mrb[0].mxu0
        %v715 = vadd.f32 0.0, %v714
        %v716 = vpop.f32.mrb[0].mxu0
        %v717 = vpop.f32.mrb[0].mxu0
        %v718 = vadd.f32 0.0, %v717
        %v719 = vpop.f32.mrb[0].mxu0
        %720 = vmatprep.mubr.bf16.mxu0 %v499
        %721 = vmatmul.mubr.bf16.gmra.mrb[0].mxu0 %v498
        %v722 = vpop.f32.mrb[0].mxu0
        %v723 = vadd.f32 0.0, %v722
        %v724 = vpop.f32.mrb[0].mxu0
        %v725 = vpop.f32.mrb[0].mxu0
        %v726 = vadd.f32 0.0, %v725
        %v727 = vpop.f32.mrb[0].mxu0
        %728 = vmatprep.mubr.bf16.mxu0 %v501
        %729 = vmatmul.mubr.bf16.gmra.mrb[0].mxu0 %v500
        %v730 = vpop.f32.mrb[0].mxu0
        %v731 = vadd.f32 0.0, %v730
        %v732 = vpop.f32.mrb[0].mxu0
        %v733 = vpop.f32.mrb[0].mxu0
        %v734 = vadd.f32 0.0, %v733
        %v735 = vpop.f32.mrb[0].mxu0
        %736 = vmatprep.mubr.bf16.mxu0 %v503
        %737 = vmatmul.mubr.bf16.gmra.mrb[0].mxu0 %v502
        %v738 = vpop.f32.mrb[0].mxu0
        %v739 = vadd.f32 0.0, %v738
        %v740 = vpop.f32.mrb[0].mxu0
        %v741 = vpop.f32.mrb[0].mxu0
        %v742 = vadd.f32 0.0, %v741
        %v743 = vpop.f32.mrb[0].mxu0
        %744 = vmatprep.mubr.bf16.mxu0 %v505
        %745 = vmatmul.mubr.bf16.gmra.mrb[0].mxu0 %v504
        %v746 = vpop.f32.mrb[0].mxu0
        %v747 = vadd.f32 0.0, %v746
        %v748 = vpop.f32.mrb[0].mxu0
        %v749 = vpop.f32.mrb[0].mxu0
        %v750 = vadd.f32 0.0, %v749
        %v751 = vpop.f32.mrb[0].mxu0
        %752 = vmatprep.mubr.bf16.mxu0 %v507
        %753 = vmatmul.mubr.bf16.gmra.mrb[0].mxu0 %v506
        %v754 = vpop.f32.mrb[0].mxu0
        %v755 = vadd.f32 0.0, %v754
        %v756 = vpop.f32.mrb[0].mxu0
        %v757 = vpop.f32.mrb[0].mxu0
        %v758 = vadd.f32 0.0, %v757
        %v759 = vpop.f32.mrb[0].mxu0
        %760 = vmatprep.mubr.bf16.mxu0 %v509
        %761 = vmatmul.mubr.bf16.gmra.mrb[0].mxu0 %v508
        %v762 = vpop.f32.mrb[0].mxu0
        %v763 = vadd.f32 0.0, %v762
        %v764 = vpop.f32.mrb[0].mxu0
        %v765 = vpop.f32.mrb[0].mxu0
        %v766 = vadd.f32 0.0, %v765
        %v767 = vpop.f32.mrb[0].mxu0
        %768 = vmatprep.mubr.bf16.mxu0 %v511
        %769 = vmatmul.mubr.bf16.gmra.mrb[0].mxu0 %v510
        %v770 = vpop.f32.mrb[0].mxu0
        %v771 = vadd.f32 0.0, %v770
        %v772 = vpop.f32.mrb[0].mxu0
        %v773 = vpop.f32.mrb[0].mxu0
        %v774 = vadd.f32 0.0, %v773
        %v775 = vpop.f32.mrb[0].mxu0
        %776 = vmatprep.mubr.bf16.mxu0 %v513
        %777 = vmatmul.mubr.bf16.gmra.mrb[0].mxu0 %v512
        %v778 = vpop.f32.mrb[0].mxu0
        %v779 = vadd.f32 0.0, %v778
        %v780 = vpop.f32.mrb[0].mxu0
        %v781 = vpop.f32.mrb[0].mxu0
        %v782 = vadd.f32 0.0, %v781
        %v783 = vpop.f32.mrb[0].mxu0
        %784 = vmatprep.mubr.bf16.mxu0 %v515
        %785 = vmatmul.mubr.bf16.gmra.mrb[0].mxu0 %v514
        %v786 = vpop.f32.mrb[0].mxu0
        %v787 = vadd.f32 0.0, %v786
        %v788 = vpop.f32.mrb[0].mxu0
        %v789 = vpop.f32.mrb[0].mxu0
        %v790 = vadd.f32 0.0, %v789
        %v791 = vpop.f32.mrb[0].mxu0
        %792 = vmatprep.mubr.bf16.mxu0 %v517
        %793 = vmatmul.mubr.bf16.gmra.mrb[0].mxu0 %v516
        %v794 = vpop.f32.mrb[0].mxu0
        %v795 = vadd.f32 0.0, %v794
        %v796 = vpop.f32.mrb[0].mxu0
        %v797 = vpop.f32.mrb[0].mxu0
        %v798 = vadd.f32 0.0, %v797
        %v799 = vpop.f32.mrb[0].mxu0
        %800 = vmatprep.mubr.bf16.mxu0 %v519
        %801 = vmatmul.mubr.bf16.gmra.mrb[0].mxu0 %v518
        %v802 = vpop.f32.mrb[0].mxu0
        %v803 = vadd.f32 0.0, %v802
        %v804 = vpop.f32.mrb[0].mxu0
        %v805 = vpop.f32.mrb[0].mxu0
        %v806 = vadd.f32 0.0, %v805
        %v807 = vpop.f32.mrb[0].mxu0
        %808 = vdwg.mxu0
        %v809 = vadd.f32 %v296, %v683
        %v810 = vadd.f32 %v297, %v686
        %v811 = vadd.f32 %v298, %v691
        %v812 = vadd.f32 %v299, %v694
        %v813 = vadd.f32 %v300, %v699
        %v814 = vadd.f32 %v301, %v702
        %v815 = vadd.f32 %v302, %v707
        %v816 = vadd.f32 %v303, %v710
        %v817 = vadd.f32 %v304, %v715
        %v818 = vadd.f32 %v305, %v718
        %v819 = vadd.f32 %v306, %v723
        %v820 = vadd.f32 %v307, %v726
        %v821 = vadd.f32 %v308, %v731
        %v822 = vadd.f32 %v309, %v734
        %v823 = vadd.f32 %v310, %v739
        %v824 = vadd.f32 %v311, %v742
        %v825 = vadd.f32 %v312, %v747
        %v826 = vadd.f32 %v313, %v750
        %v827 = vadd.f32 %v314, %v755
        %v828 = vadd.f32 %v315, %v758
        %v829 = vadd.f32 %v316, %v763
        %v830 = vadd.f32 %v317, %v766
        %v831 = vadd.f32 %v318, %v771
        %v832 = vadd.f32 %v319, %v774
        %v833 = vadd.f32 %v320, %v779
        %v834 = vadd.f32 %v321, %v782
        %v835 = vadd.f32 %v322, %v787
        %v836 = vadd.f32 %v323, %v790
        %v837 = vadd.f32 %v324, %v795
        %v838 = vadd.f32 %v325, %v798
        %v839 = vadd.f32 %v326, %v803
        %v840 = vadd.f32 %v327, %v806
        %841 = vst [vmem:[#allocation2] sm:$0xff] %v809
        %842 = vst [vmem:[#allocation2 + $0x8] sm:$0xff] %v810
        %843 = vst [vmem:[#allocation2 + $0x10] sm:$0xff] %v811
        %844 = vst [vmem:[#allocation2 + $0x18] sm:$0xff] %v812
        %845 = vst [vmem:[#allocation2 + $0x20] sm:$0xff] %v813
        %846 = vst [vmem:[#allocation2 + $0x28] sm:$0xff] %v814
        %847 = vst [vmem:[#allocation2 + $0x30] sm:$0xff] %v815
        %848 = vst [vmem:[#allocation2 + $0x38] sm:$0xff] %v816
        %849 = vst [vmem:[#allocation2 + $0x40] sm:$0xff] %v817
        %850 = vst [vmem:[#allocation2 + $0x48] sm:$0xff] %v818
        %851 = vst [vmem:[#allocation2 + $0x50] sm:$0xff] %v819
        %852 = vst [vmem:[#allocation2 + $0x58] sm:$0xff] %v820
        %853 = vst [vmem:[#allocation2 + $0x60] sm:$0xff] %v821
        %854 = vst [vmem:[#allocation2 + $0x68] sm:$0xff] %v822
        %855 = vst [vmem:[#allocation2 + $0x70] sm:$0xff] %v823
        %856 = vst [vmem:[#allocation2 + $0x78] sm:$0xff] %v824
        %857 = vst [vmem:[#allocation2 + $0x80] sm:$0xff] %v825
        %858 = vst [vmem:[#allocation2 + $0x88] sm:$0xff] %v826
        %859 = vst [vmem:[#allocation2 + $0x90] sm:$0xff] %v827
        %860 = vst [vmem:[#allocation2 + $0x98] sm:$0xff] %v828
        %861 = vst [vmem:[#allocation2 + $0xa0] sm:$0xff] %v829
        %862 = vst [vmem:[#allocation2 + $0xa8] sm:$0xff] %v830
        %863 = vst [vmem:[#allocation2 + $0xb0] sm:$0xff] %v831
        %864 = vst [vmem:[#allocation2 + $0xb8] sm:$0xff] %v832
        %865 = vst [vmem:[#allocation2 + $0xc0] sm:$0xff] %v833
        %866 = vst [vmem:[#allocation2 + $0xc8] sm:$0xff] %v834
        %867 = vst [vmem:[#allocation2 + $0xd0] sm:$0xff] %v835
        %868 = vst [vmem:[#allocation2 + $0xd8] sm:$0xff] %v836
        %869 = vst [vmem:[#allocation2 + $0xe0] sm:$0xff] %v837
        %870 = vst [vmem:[#allocation2 + $0xe8] sm:$0xff] %v838
        %871 = vst [vmem:[#allocation2 + $0xf0] sm:$0xff] %v839
        %872 = vst [vmem:[#allocation2 + $0xf8] sm:$0xff] %v840
        // Predicated region
        $region37: #{conv_im2col.1} parent=31 // pred_check
          %p873 = pneg %p260
        $region38: #{conv_im2col.1} parent=31 // pred_check_branch
          %875 = sbr.rel (%p873) target = $region40
        $region39: #{conv_im2col.1} parent=31 // pred_region
          %v876 = vld [vmem:[#allocation2] sm:$0xff]
          %v877 = vld [vmem:[#allocation2 + $0x8] sm:$0xff]
          %v878 = vld [vmem:[#allocation2 + $0x10] sm:$0xff]
          %v879 = vld [vmem:[#allocation2 + $0x18] sm:$0xff]
          %v880 = vld [vmem:[#allocation2 + $0x20] sm:$0xff]
          %v881 = vld [vmem:[#allocation2 + $0x28] sm:$0xff]
          %v882 = vld [vmem:[#allocation2 + $0x30] sm:$0xff]
          %v883 = vld [vmem:[#allocation2 + $0x38] sm:$0xff]
          %v884 = vld [vmem:[#allocation2 + $0x40] sm:$0xff]
          %v885 = vld [vmem:[#allocation2 + $0x48] sm:$0xff]
          %v886 = vld [vmem:[#allocation2 + $0x50] sm:$0xff]
          %v887 = vld [vmem:[#allocation2 + $0x58] sm:$0xff]
          %v888 = vld [vmem:[#allocation2 + $0x60] sm:$0xff]
          %v889 = vld [vmem:[#allocation2 + $0x68] sm:$0xff]
          %v890 = vld [vmem:[#allocation2 + $0x70] sm:$0xff]
          %v891 = vld [vmem:[#allocation2 + $0x78] sm:$0xff]
          %v892 = vld [vmem:[#allocation2 + $0x80] sm:$0xff]
          %v893 = vld [vmem:[#allocation2 + $0x88] sm:$0xff]
          %v894 = vld [vmem:[#allocation2 + $0x90] sm:$0xff]
          %v895 = vld [vmem:[#allocation2 + $0x98] sm:$0xff]
          %v896 = vld [vmem:[#allocation2 + $0xa0] sm:$0xff]
          %v897 = vld [vmem:[#allocation2 + $0xa8] sm:$0xff]
          %v898 = vld [vmem:[#allocation2 + $0xb0] sm:$0xff]
          %v899 = vld [vmem:[#allocation2 + $0xb8] sm:$0xff]
          %v900 = vld [vmem:[#allocation2 + $0xc0] sm:$0xff]
          %v901 = vld [vmem:[#allocation2 + $0xc8] sm:$0xff]
          %v902 = vld [vmem:[#allocation2 + $0xd0] sm:$0xff]
          %v903 = vld [vmem:[#allocation2 + $0xd8] sm:$0xff]
          %v904 = vld [vmem:[#allocation2 + $0xe0] sm:$0xff]
          %v905 = vld [vmem:[#allocation2 + $0xe8] sm:$0xff]
          %v906 = vld [vmem:[#allocation2 + $0xf0] sm:$0xff]
          %v907 = vld [vmem:[#allocation2 + $0xf8] sm:$0xff]
          %v908 = vld [vmem:[%s257] sm:$0x1]
          %v910 = vlaneseq
          %v911 = vshrl.u32 %v910, 7
          %v912 = vsub.s32 0, %v911
          %v913 = vrot.slane %v908, %v912
          %v915 = vadd.f32 %v876, %v913
          %v916 = vadd.f32 %v877, %v913
          %v917 = vadd.f32 %v878, %v913
          %v918 = vadd.f32 %v879, %v913
          %v919 = vadd.f32 %v880, %v913
          %v920 = vadd.f32 %v881, %v913
          %v921 = vadd.f32 %v882, %v913
          %v922 = vadd.f32 %v883, %v913
          %v923 = vadd.f32 %v884, %v913
          %v924 = vadd.f32 %v885, %v913
          %v925 = vadd.f32 %v886, %v913
          %v926 = vadd.f32 %v887, %v913
          %v927 = vadd.f32 %v888, %v913
          %v928 = vadd.f32 %v889, %v913
          %v929 = vadd.f32 %v890, %v913
          %v930 = vadd.f32 %v891, %v913
          %v931 = vadd.f32 %v892, %v913
          %v932 = vadd.f32 %v893, %v913
          %v933 = vadd.f32 %v894, %v913
          %v934 = vadd.f32 %v895, %v913
          %v935 = vadd.f32 %v896, %v913
          %v936 = vadd.f32 %v897, %v913
          %v937 = vadd.f32 %v898, %v913
          %v938 = vadd.f32 %v899, %v913
          %v939 = vadd.f32 %v900, %v913
          %v940 = vadd.f32 %v901, %v913
          %v941 = vadd.f32 %v902, %v913
          %v942 = vadd.f32 %v903, %v913
          %v943 = vadd.f32 %v904, %v913
          %v944 = vadd.f32 %v905, %v913
          %v945 = vadd.f32 %v906, %v913
          %v946 = vadd.f32 %v907, %v913
          %v947 = vmax.f32 %v915, 0.0
          %v948 = vmax.f32 %v916, 0.0
          %v949 = vmax.f32 %v917, 0.0
          %v950 = vmax.f32 %v918, 0.0
          %v951 = vmax.f32 %v919, 0.0
          %v952 = vmax.f32 %v920, 0.0
          %v953 = vmax.f32 %v921, 0.0
          %v954 = vmax.f32 %v922, 0.0
          %v955 = vmax.f32 %v923, 0.0
          %v956 = vmax.f32 %v924, 0.0
          %v957 = vmax.f32 %v925, 0.0
          %v958 = vmax.f32 %v926, 0.0
          %v959 = vmax.f32 %v927, 0.0
          %v960 = vmax.f32 %v928, 0.0
          %v961 = vmax.f32 %v929, 0.0
          %v962 = vmax.f32 %v930, 0.0
          %v963 = vmax.f32 %v931, 0.0
          %v964 = vmax.f32 %v932, 0.0
          %v965 = vmax.f32 %v933, 0.0
          %v966 = vmax.f32 %v934, 0.0
          %v967 = vmax.f32 %v935, 0.0
          %v968 = vmax.f32 %v936, 0.0
          %v969 = vmax.f32 %v937, 0.0
          %v970 = vmax.f32 %v938, 0.0
          %v971 = vmax.f32 %v939, 0.0
          %v972 = vmax.f32 %v940, 0.0
          %v973 = vmax.f32 %v941, 0.0
          %v974 = vmax.f32 %v942, 0.0
          %v975 = vmax.f32 %v943, 0.0
          %v976 = vmax.f32 %v944, 0.0
          %v977 = vmax.f32 %v945, 0.0
          %v978 = vmax.f32 %v946, 0.0
          %v979 = vpack.c.bf16 %v948, %v947
          %v980 = vpack.c.bf16 %v950, %v949
          %v981 = vpack.c.bf16 %v952, %v951
          %v982 = vpack.c.bf16 %v954, %v953
          %v983 = vpack.c.bf16 %v956, %v955
          %v984 = vpack.c.bf16 %v958, %v957
          %v985 = vpack.c.bf16 %v960, %v959
          %v986 = vpack.c.bf16 %v962, %v961
          %v987 = vpack.c.bf16 %v964, %v963
          %v988 = vpack.c.bf16 %v966, %v965
          %v989 = vpack.c.bf16 %v968, %v967
          %v990 = vpack.c.bf16 %v970, %v969
          %v991 = vpack.c.bf16 %v972, %v971
          %v992 = vpack.c.bf16 %v974, %v973
          %v993 = vpack.c.bf16 %v976, %v975
          %v994 = vpack.c.bf16 %v978, %v977
          %v1011 = vunpack.c.l.b16 %v979
          %v1012 = vunpack.c.h.b16 %v979
          %v1013 = vunpack.c.l.b16 %v980
          %v1014 = vunpack.c.h.b16 %v980
          %v1015 = vunpack.c.l.b16 %v981
          %v1016 = vunpack.c.h.b16 %v981
          %v1017 = vunpack.c.l.b16 %v982
          %v1018 = vunpack.c.h.b16 %v982
          %v1019 = vunpack.c.l.b16 %v983
          %v1020 = vunpack.c.h.b16 %v983
          %v1021 = vunpack.c.l.b16 %v984
          %v1022 = vunpack.c.h.b16 %v984
          %v1023 = vunpack.c.l.b16 %v985
          %v1024 = vunpack.c.h.b16 %v985
          %v1025 = vunpack.c.l.b16 %v986
          %v1026 = vunpack.c.h.b16 %v986
          %v1027 = vunpack.c.l.b16 %v987
          %v1028 = vunpack.c.h.b16 %v987
          %v1029 = vunpack.c.l.b16 %v988
          %v1030 = vunpack.c.h.b16 %v988
          %v1031 = vunpack.c.l.b16 %v989
          %v1032 = vunpack.c.h.b16 %v989
          %v1033 = vunpack.c.l.b16 %v990
          %v1034 = vunpack.c.h.b16 %v990
          %v1035 = vunpack.c.l.b16 %v991
          %v1036 = vunpack.c.h.b16 %v991
          %v1037 = vunpack.c.l.b16 %v992
          %v1038 = vunpack.c.h.b16 %v992
          %v1039 = vunpack.c.l.b16 %v993
          %v1040 = vunpack.c.h.b16 %v993
          %v1041 = vunpack.c.l.b16 %v994
          %v1042 = vunpack.c.h.b16 %v994
          %v1043 = vpack.c.b16 %v1011, %v1011
          %v1044 = vpack.c.b16 %v1012, %v1012
          %v1045 = vpack.c.b16 %v1013, %v1013
          %v1046 = vpack.c.b16 %v1014, %v1014
          %v1047 = vpack.c.b16 %v1015, %v1015
          %v1048 = vpack.c.b16 %v1016, %v1016
          %v1049 = vpack.c.b16 %v1017, %v1017
          %v1050 = vpack.c.b16 %v1018, %v1018
          %v1051 = vpack.c.b16 %v1019, %v1019
          %v1052 = vpack.c.b16 %v1020, %v1020
          %v1053 = vpack.c.b16 %v1021, %v1021
          %v1054 = vpack.c.b16 %v1022, %v1022
          %v1055 = vpack.c.b16 %v1023, %v1023
          %v1056 = vpack.c.b16 %v1024, %v1024
          %v1057 = vpack.c.b16 %v1025, %v1025
          %v1058 = vpack.c.b16 %v1026, %v1026
          %v1059 = vpack.c.b16 %v1027, %v1027
          %v1060 = vpack.c.b16 %v1028, %v1028
          %v1061 = vpack.c.b16 %v1029, %v1029
          %v1062 = vpack.c.b16 %v1030, %v1030
          %v1063 = vpack.c.b16 %v1031, %v1031
          %v1064 = vpack.c.b16 %v1032, %v1032
          %v1065 = vpack.c.b16 %v1033, %v1033
          %v1066 = vpack.c.b16 %v1034, %v1034
          %v1067 = vpack.c.b16 %v1035, %v1035
          %v1068 = vpack.c.b16 %v1036, %v1036
          %v1069 = vpack.c.b16 %v1037, %v1037
          %v1070 = vpack.c.b16 %v1038, %v1038
          %v1071 = vpack.c.b16 %v1039, %v1039
          %v1072 = vpack.c.b16 %v1040, %v1040
          %v1073 = vpack.c.b16 %v1041, %v1041
          %v1074 = vpack.c.b16 %v1042, %v1042
          %1107 = vst [vmem:[%s233] sm:$0xf] %v1043
          %1108 = vst [vmem:[%s233 + $0x4] sm:$0xf] %v1044
          %1109 = vst [vmem:[%s233 + $0x8] sm:$0xf] %v1045
          %1110 = vst [vmem:[%s233 + $0xc] sm:$0xf] %v1046
          %1111 = vst [vmem:[%s233 + $0x10] sm:$0xf] %v1047
          %1112 = vst [vmem:[%s233 + $0x14] sm:$0xf] %v1048
          %1113 = vst [vmem:[%s233 + $0x18] sm:$0xf] %v1049
          %1114 = vst [vmem:[%s233 + $0x1c] sm:$0xf] %v1050
          %1115 = vst [vmem:[%s233 + $0x20] sm:$0xf] %v1051
          %1116 = vst [vmem:[%s233 + $0x24] sm:$0xf] %v1052
          %1117 = vst [vmem:[%s233 + $0x28] sm:$0xf] %v1053
          %1118 = vst [vmem:[%s233 + $0x2c] sm:$0xf] %v1054
          %1119 = vst [vmem:[%s233 + $0x30] sm:$0xf] %v1055
          %1120 = vst [vmem:[%s233 + $0x34] sm:$0xf] %v1056
          %1121 = vst [vmem:[%s233 + $0x38] sm:$0xf] %v1057
          %1122 = vst [vmem:[%s233 + $0x3c] sm:$0xf] %v1058
          %1123 = vst [vmem:[%s233 + $0x40] sm:$0xf] %v1059
          %1124 = vst [vmem:[%s233 + $0x44] sm:$0xf] %v1060
          %1125 = vst [vmem:[%s233 + $0x48] sm:$0xf] %v1061
          %1126 = vst [vmem:[%s233 + $0x4c] sm:$0xf] %v1062
          %1127 = vst [vmem:[%s233 + $0x50] sm:$0xf] %v1063
          %1128 = vst [vmem:[%s233 + $0x54] sm:$0xf] %v1064
          %1129 = vst [vmem:[%s233 + $0x58] sm:$0xf] %v1065
          %1130 = vst [vmem:[%s233 + $0x5c] sm:$0xf] %v1066
          %1131 = vst [vmem:[%s233 + $0x60] sm:$0xf] %v1067
          %1132 = vst [vmem:[%s233 + $0x64] sm:$0xf] %v1068
          %1133 = vst [vmem:[%s233 + $0x68] sm:$0xf] %v1069
          %1134 = vst [vmem:[%s233 + $0x6c] sm:$0xf] %v1070
          %1135 = vst [vmem:[%s233 + $0x70] sm:$0xf] %v1071
          %1136 = vst [vmem:[%s233 + $0x74] sm:$0xf] %v1072
          %1137 = vst [vmem:[%s233 + $0x78] sm:$0xf] %v1073
          %1138 = vst [vmem:[%s233 + $0x7c] sm:$0xf] %v1074
        $region40: #{conv_im2col.1} parent=31 // pred_fallthru
          _
        %s1139 = sand.u32 %s128, 1
        %s1140 = scalar_lea.sflag [#allocation4], %s1139
        %s1141 = sand.u32 %s128, 1
        %s1142 = smul.addr %s1141, 128
        %s1143 = scalar_lea.vmem [#allocation3], %s1142
        // Predicated region
        $region41: #{conv_im2col.1} parent=31 // pred_check
          %p1144 = pneg %p138
        $region42: #{conv_im2col.1} parent=31 // pred_check_branch
          %1146 = sbr.rel (%p1144) target = $region44
        $region43: #{conv_im2col.1} parent=31 // pred_region
          %s1147 = smul.u32 32, %s22
          %s1149 = ssub.s32 2048, 2048
          %1150 = vsyncadd %s1140, %s1149
          %s1151 = sadd.s32 %s23, %s1147
          %s1152 = smul.addr %s1151, 64
          %s1153 = scalar_lea.hbm %s3, %s1152
          %s1154 = sshll.u32 %s1143, 4
          %s1155 = int_to_ptr.vmem [resolvable:$true] %s1154
          %1160 = dma.vmem_to_hbm [thread:$0]  %s1155, 2048, %s1153, %s1140, 64, 64, 4
        $region44: #{conv_im2col.1} parent=31 // pred_fallthru
          _
      $region32: #{conv_im2col.1} parent=5 // pred_fallthru
        _
      %p1161 = scmp.le.s32.totalorder 2, %s12
      // Predicated region
      $region45: #{conv_im2col.1} parent=5 // pred_check
        %p1162 = pneg %p1161
      $region46: #{conv_im2col.1} parent=5 // pred_check_branch
        %1164 = sbr.rel (%p1162) target = $region48
      $region47: #{conv_im2col.1} parent=5 // pred_region
        %s1165 = ssub.s32 %s12, 2
        // Predicated region
        $region49: #{conv_im2col.1} parent=47 // pred_check
          %p1166 = pneg %p144
        $region50: #{conv_im2col.1} parent=47 // pred_check_branch
          %1168 = sbr.rel (%p1166) target = $region52
        $region51: #{conv_im2col.1} parent=47 // pred_region
          %s1169 = sand.u32 %s129, 1
          %s1170 = scalar_lea.sflag [#allocation4], %s1169
          %s1171 = sand.u32 %s129, 1
          %s1172 = smul.addr %s1171, 128
          %s1173 = scalar_lea.vmem [#allocation3], %s1172
          %1174 = dma.done %s1170, 2048
        $region52: #{conv_im2col.1} parent=47 // pred_fallthru
          _
      $region48: #{conv_im2col.1} parent=5 // pred_fallthru
        _
    $region6: #{conv_im2col.1} parent=1 // loop_footer
      %s16 = sadd.s32 1, %s12
    $region7: #{conv_im2col.1} parent=1 // loop_footer_branch
      %11 = sbr.rel target = $region3
    $region8: #{conv_im2col.1} parent=1 // loop_exit
      _
    %1175 = vsyncpa [#allocation4], 1
    %s1176 = scalar_lea.sflag [#allocation4], 1
    %1177 = vsyncpa %s1176, 1

</llo_original>
